<compile_context>
chip_gen: v7x
topology: tpu7x:2x2x1
jax: 0.10.0
libtpu: 0.0.40
codegen_flags: <defaults>
</compile_context>

<pallas_src>
import functools

import jax
import jax.numpy as jnp
from jax.experimental import pallas as pl
from jax.experimental.pallas import tpu as pltpu


def _round_up(x, m):
    return (x + m - 1) // m * m


def _two_layer_kernel(x_ref, w1_ref, b1_ref, w2_ref, b2_ref, o_ref):
    # hidden = relu(x @ W1 + b1): MXU matmul with f32 accumulation,
    # bias-add + clamp(min=0) in f32 on the VPU.
    h = jnp.dot(x_ref[...], w1_ref[...], preferred_element_type=jnp.float32)
    h = jnp.maximum(h + b1_ref[...], 0.0)                 # (TILE_N, Hp) + (1, Hp)
    # out = hidden @ W2 + b2
    out = jnp.dot(h.astype(w2_ref.dtype), w2_ref[...],
                  preferred_element_type=jnp.float32)
    o_ref[...] = (out + b2_ref[...]).astype(o_ref.dtype)  # (TILE_N, D_out_p)


@functools.partial(jax.jit, static_argnames=("tile_n", "compute_dtype"))
def two_layer_net(x, w1, b1, w2, b2, *, tile_n=256, compute_dtype=jnp.float32):
    """Fused Linear->ReLU->Linear.

    x:  (N, D_in)
    w1: (H, D_in),  b1: (H,)       -- torch nn.Linear layout (out, in)
    w2: (D_out, H), b2: (D_out,)
    Returns (N, D_out) float32.
    """
    N, D_in = x.shape
    H, _ = w1.shape
    D_out, _ = w2.shape

    # Lane-dense padding: feature dims to multiples of 128, rows to the tile.
    d_in_p = _round_up(D_in, 128)
    h_p = _round_up(H, 128)
    d_out_p = _round_up(D_out, 128)
    tile_n = min(tile_n, _round_up(N, 8))
    n_p = _round_up(N, tile_n)

    # Pre-transpose weights to (in, out), zero-pad everything; biases kept as
    # (1, dim) f32 VMEM tiles (epilogue stays fused and in f32).
    w1_t = jnp.zeros((d_in_p, h_p), compute_dtype).at[:D_in, :H].set(
        w1.T.astype(compute_dtype))
    w2_t = jnp.zeros((h_p, d_out_p), compute_dtype).at[:H, :D_out].set(
        w2.T.astype(compute_dtype))
    b1_p = jnp.zeros((1, h_p), jnp.float32).at[0, :H].set(b1.astype(jnp.float32))
    b2_p = jnp.zeros((1, d_out_p), jnp.float32).at[0, :D_out].set(
        b2.astype(jnp.float32))
    x_p = jnp.zeros((n_p, d_in_p), compute_dtype).at[:N, :D_in].set(
        x.astype(compute_dtype))

    out_p = pl.pallas_call(
        _two_layer_kernel,
        out_shape=jax.ShapeDtypeStruct((n_p, d_out_p), jnp.float32),
        grid=(n_p // tile_n,),
        in_specs=[
            pl.BlockSpec((tile_n, d_in_p), lambda i: (i, 0)),   # x: row-tiled
            pl.BlockSpec((d_in_p, h_p), lambda i: (0, 0)),      # w1: resident
            pl.BlockSpec((1, h_p), lambda i: (0, 0)),           # b1: resident
            pl.BlockSpec((h_p, d_out_p), lambda i: (0, 0)),     # w2: resident
            pl.BlockSpec((1, d_out_p), lambda i: (0, 0)),       # b2: resident
        ],
        out_specs=pl.BlockSpec((tile_n, d_out_p), lambda i: (i, 0)),
        compiler_params=pltpu.CompilerParams(
            dimension_semantics=("parallel",),
        ),
    )(x_p, w1_t, b1_p, w2_t, b2_p)

    # Strip the padding outside the kernel.
    return out_p[:N, :D_out]


def _ref_forward(x, w1, b1, w2, b2):
    h = jnp.maximum(x @ w1.T + b1, 0.0)
    return h @ w2.T + b2


if __name__ == "__main__":
    # Module defaults: D_in=1000, H=100, D_out=10.
    D_in, H, D_out = 1000, 100, 10

    key = jax.random.PRNGKey(0)
    kx, kw1, kb1, kw2, kb2 = jax.random.split(key, 5)

    # Deterministic "PyTorch-style" init: uniform(-1/sqrt(fan_in), 1/sqrt(fan_in)).
    bound1 = 1.0 / (D_in ** 0.5)
    w1 = jax.random.uniform(kw1, (H, D_in), minval=-bound1, maxval=bound1,
                            dtype=jnp.float32)
    b1 = jax.random.uniform(kb1, (H,), minval=-bound1, maxval=bound1,
                            dtype=jnp.float32)
    bound2 = 1.0 / (H ** 0.5)
    w2 = jax.random.uniform(kw2, (D_out, H), minval=-bound2, maxval=bound2,
                            dtype=jnp.float32)
    b2 = jax.random.uniform(kb2, (D_out,), minval=-bound2, maxval=bound2,
                            dtype=jnp.float32)

    # Small batch (N=8): single grid step, f32 path, tight tolerance.
    x_small = jax.random.normal(kx, (8, D_in), dtype=jnp.float32)
    out_small = jax.block_until_ready(two_layer_net(x_small, w1, b1, w2, b2))
    ref_small = _ref_forward(x_small, w1, b1, w2, b2)
    assert out_small.shape == (8, D_out)
    assert jnp.allclose(out_small, ref_small, atol=1e-3, rtol=1e-3), \
        "f32 small-batch mismatch vs reference"

    # Larger batch (N=512): exercises the row-tiled grid with VMEM-resident weights.
    x_big = jax.random.normal(kx, (512, D_in), dtype=jnp.float32)
    out_big = jax.block_until_ready(
        two_layer_net(x_big, w1, b1, w2, b2, tile_n=256))
    ref_big = _ref_forward(x_big, w1, b1, w2, b2)
    assert out_big.shape == (512, D_out)
    assert jnp.allclose(out_big, ref_big, atol=1e-3, rtol=1e-3), \
        "f32 tiled-batch mismatch vs reference"

    # bf16 compute path (halves w1 DMA bytes; f32 accumulation) — looser tolerance.
    out_bf16 = jax.block_until_ready(
        two_layer_net(x_big, w1, b1, w2, b2, tile_n=256,
                      compute_dtype=jnp.bfloat16))
    assert jnp.allclose(out_bf16, ref_big, atol=5e-2, rtol=5e-2), \
        "bf16 path mismatch vs reference"

    print("KERNEL_OK")
</pallas_src>

<mosaic_0001>
module attributes {stable_mosaic.version = 11 : i64} {
  func.func @_two_layer_kernel(%arg0: i32, %arg1: memref<8x1024xf32, #tpu.memory_space<vmem>>, %arg2: memref<1024x128xf32, #tpu.memory_space<vmem>>, %arg3: memref<1x128xf32, #tpu.memory_space<vmem>>, %arg4: memref<128x128xf32, #tpu.memory_space<vmem>>, %arg5: memref<1x128xf32, #tpu.memory_space<vmem>>, %arg6: memref<8x128xf32, #tpu.memory_space<vmem>>) attributes {dimension_semantics = [#tpu.dimension_semantics<parallel>], iteration_bounds = array<i64: 1>, scalar_prefetch = 0 : i64, scratch_operands = 0 : i64, tpu.core_type = #tpu.core_type<tc>, window_params = [{transform_indices = @transform_0, window_bounds = array<i64: 8, 1024>}, {pipeline_mode = #tpu.pipeline_mode<synchronous>, transform_indices = @transform_1, window_bounds = array<i64: 1024, 128>}, {pipeline_mode = #tpu.pipeline_mode<synchronous>, transform_indices = @transform_2, window_bounds = array<i64: 1, 128>}, {pipeline_mode = #tpu.pipeline_mode<synchronous>, transform_indices = @transform_3, window_bounds = array<i64: 128, 128>}, {pipeline_mode = #tpu.pipeline_mode<synchronous>, transform_indices = @transform_4, window_bounds = array<i64: 1, 128>}, {transform_indices = @transform_5, window_bounds = array<i64: 8, 128>}]} {
    %c0 = arith.constant 0 : index
    %c0_0 = arith.constant 0 : index
    %0 = vector.load %arg1[%c0, %c0_0] : memref<8x1024xf32, #tpu.memory_space<vmem>>, vector<8x1024xf32>
    %c0_1 = arith.constant 0 : index
    %c0_2 = arith.constant 0 : index
    %1 = vector.load %arg2[%c0_1, %c0_2] : memref<1024x128xf32, #tpu.memory_space<vmem>>, vector<1024x128xf32>
    %cst = arith.constant dense<0.000000e+00> : vector<8x128xf32>
    %2 = tpu.matmul %0, %1, %cst {dimension_numbers = #tpu.dot_dimension_numbers<[1], [0], [0], [1], [0, 0, 1, 1], [], []>} : vector<8x1024xf32>, vector<1024x128xf32>, vector<8x128xf32> -> vector<8x128xf32>
    %c0_3 = arith.constant 0 : index
    %c0_4 = arith.constant 0 : index
    %3 = vector.load %arg3[%c0_3, %c0_4] : memref<1x128xf32, #tpu.memory_space<vmem>>, vector<1x128xf32>
    %4 = vector.broadcast %3 : vector<1x128xf32> to vector<8x128xf32>
    %5 = arith.addf %2, %4 : vector<8x128xf32>
    %cst_5 = arith.constant 0.000000e+00 : f32
    %6 = vector.broadcast %cst_5 : f32 to vector<8x128xf32>
    %7 = arith.maximumf %5, %6 : vector<8x128xf32>
    %c0_6 = arith.constant 0 : index
    %c0_7 = arith.constant 0 : index
    %8 = vector.load %arg4[%c0_6, %c0_7] : memref<128x128xf32, #tpu.memory_space<vmem>>, vector<128x128xf32>
    %cst_8 = arith.constant dense<0.000000e+00> : vector<8x128xf32>
    %9 = tpu.matmul %7, %8, %cst_8 {dimension_numbers = #tpu.dot_dimension_numbers<[1], [0], [0], [1], [0, 0, 1, 1], [], []>} : vector<8x128xf32>, vector<128x128xf32>, vector<8x128xf32> -> vector<8x128xf32>
    %c0_9 = arith.constant 0 : index
    %c0_10 = arith.constant 0 : index
    %10 = vector.load %arg5[%c0_9, %c0_10] : memref<1x128xf32, #tpu.memory_space<vmem>>, vector<1x128xf32>
    %11 = vector.broadcast %10 : vector<1x128xf32> to vector<8x128xf32>
    %12 = arith.addf %9, %11 : vector<8x128xf32>
    %c0_11 = arith.constant 0 : index
    %c0_12 = arith.constant 0 : index
    %13 = vector.load %arg6[%c0_11, %c0_12] : memref<8x128xf32, #tpu.memory_space<vmem>>, vector<8x128xf32>
    tpu.vector_store %arg6[%c0_11, %c0_12], %12 {strides = array<i32>} : memref<8x128xf32, #tpu.memory_space<vmem>>, vector<8x128xf32>,
    return
  }
  func.func @transform_0(%arg0: i32) -> (i32, i32) {
    %c0_i32 = arith.constant 0 : i32
    %c0_i32_0 = arith.constant 0 : i32
    return %arg0, %c0_i32 : i32, i32
  }
  func.func @transform_1(%arg0: i32) -> (i32, i32) {
    %c0_i32 = arith.constant 0 : i32
    %c0_i32_0 = arith.constant 0 : i32
    %c0_i32_1 = arith.constant 0 : i32
    return %c0_i32, %c0_i32_0 : i32, i32
  }
  func.func @transform_2(%arg0: i32) -> (i32, i32) {
    %c0_i32 = arith.constant 0 : i32
    %c0_i32_0 = arith.constant 0 : i32
    %c0_i32_1 = arith.constant 0 : i32
    return %c0_i32, %c0_i32_0 : i32, i32
  }
  func.func @transform_3(%arg0: i32) -> (i32, i32) {
    %c0_i32 = arith.constant 0 : i32
    %c0_i32_0 = arith.constant 0 : i32
    %c0_i32_1 = arith.constant 0 : i32
    return %c0_i32, %c0_i32_0 : i32, i32
  }
  func.func @transform_4(%arg0: i32) -> (i32, i32) {
    %c0_i32 = arith.constant 0 : i32
    %c0_i32_0 = arith.constant 0 : i32
    %c0_i32_1 = arith.constant 0 : i32
    return %c0_i32, %c0_i32_0 : i32, i32
  }
  func.func @transform_5(%arg0: i32) -> (i32, i32) {
    %c0_i32 = arith.constant 0 : i32
    %c0_i32_0 = arith.constant 0 : i32
    return %arg0, %c0_i32 : i32, i32
  }
}

</mosaic_0001>

<llo_original>
// kernel: two_layer_net.1
$region0: #{two_layer_net.1}
  #allocation0 [shape = 'u32[]', space=smem, size = 0x4, offset = 0x4, fixed_abs, tag = 'smem constant byte address 0x4 - core index']
  #allocation1 [shape = 'u32[144,128]{1,0:T(1,128)}', space=vmem, size = 0x12000, scoped, tag = 'internal scratch']
  %s0 = inlined_call_operand.vmem [shape: f32[8,1024], index: 0, kind: input, shape index: {}]
  %s1 = inlined_call_operand.vmem [shape: f32[1024,128], index: 1, kind: input, shape index: {}]
  %s2 = inlined_call_operand.vmem [shape: f32[1,128], index: 2, kind: input, shape index: {}]
  %s3 = inlined_call_operand.vmem [shape: f32[128,128], index: 3, kind: input, shape index: {}]
  %s4 = inlined_call_operand.vmem [shape: f32[1,128], index: 4, kind: input, shape index: {}]
  %s5 = inlined_call_operand.hbm [shape: f32[8,128], index: 5, kind: output, shape index: {}]
  %s6 = sld [smem:[#allocation0]]
  $region30: #{two_layer_net.1} parent=0
    _
  %s8 = ssub.s32 1, %s6
  %s9 = scalar_select 0, %s8, %s6
  $region1: #{two_layer_net.1} parent=0
    #allocation2 [shape = 'u8[4096]{0}', space=vmem, size = 0x1000, scoped, tag = 'output window, operand 0, single buffered']
    #allocation3 [shape = 's32[1]{0}', space=sflag, size = 0x4, scoped, tag = 'scoped memory for two_layer_net.1']
    %10 = vsyncpa [#allocation3], 0
    // Predicated region
    $region2: #{two_layer_net.1} parent=1 // pred_check
      _
    $region3: #{two_layer_net.1} parent=1 // pred_check_branch
      %12 = sbr.rel (0) target = $region5
    $region4: #{two_layer_net.1} parent=1 // pred_region
      _
    $region5: #{two_layer_net.1} parent=1 // pred_fallthru
      _
    // Predicated region
    $region6: #{two_layer_net.1} parent=1 // pred_check
      _
    $region7: #{two_layer_net.1} parent=1 // pred_check_branch
      %14 = sbr.rel (0) target = $region9
    $region8: #{two_layer_net.1} parent=1 // pred_region
      _
    $region9: #{two_layer_net.1} parent=1 // pred_fallthru
      _
    // Predicated region
    $region10: #{two_layer_net.1} parent=1 // pred_check
      _
    $region11: #{two_layer_net.1} parent=1 // pred_check_branch
      %16 = sbr.rel (0) target = $region13
    $region12: #{two_layer_net.1} parent=1 // pred_region
      _
    $region13: #{two_layer_net.1} parent=1 // pred_fallthru
      _
    // Predicated region
    $region14: #{two_layer_net.1} parent=1 // pred_check
      _
    $region15: #{two_layer_net.1} parent=1 // pred_check_branch
      %18 = sbr.rel (0) target = $region17
    $region16: #{two_layer_net.1} parent=1 // pred_region
      _
    $region17: #{two_layer_net.1} parent=1 // pred_fallthru
      _
    // Predicated region
    $region18: #{two_layer_net.1} parent=1 // pred_check
      _
    $region19: #{two_layer_net.1} parent=1 // pred_check_branch
      %20 = sbr.rel (0) target = $region21
    $region20: #{two_layer_net.1} parent=1 // pred_region
      _
    $region21: #{two_layer_net.1} parent=1 // pred_fallthru
      _
    %v21 = vld [vmem:[%s0] sm:$0xff]
    %v22 = vld [vmem:[%s0 + $0x8] sm:$0xff]
    %v23 = vld [vmem:[%s0 + $0x10] sm:$0xff]
    %v24 = vld [vmem:[%s0 + $0x18] sm:$0xff]
    %v25 = vld [vmem:[%s0 + $0x20] sm:$0xff]
    %v26 = vld [vmem:[%s0 + $0x28] sm:$0xff]
    %v27 = vld [vmem:[%s0 + $0x30] sm:$0xff]
    %v28 = vld [vmem:[%s0 + $0x38] sm:$0xff]
    %v29 = vld [vmem:[%s1] sm:$0xff]
    %v30 = vld [vmem:[%s1 + $0x8] sm:$0xff]
    %v31 = vld [vmem:[%s1 + $0x10] sm:$0xff]
    %v32 = vld [vmem:[%s1 + $0x18] sm:$0xff]
    %v33 = vld [vmem:[%s1 + $0x20] sm:$0xff]
    %v34 = vld [vmem:[%s1 + $0x28] sm:$0xff]
    %v35 = vld [vmem:[%s1 + $0x30] sm:$0xff]
    %v36 = vld [vmem:[%s1 + $0x38] sm:$0xff]
    %v37 = vld [vmem:[%s1 + $0x40] sm:$0xff]
    %v38 = vld [vmem:[%s1 + $0x48] sm:$0xff]
    %v39 = vld [vmem:[%s1 + $0x50] sm:$0xff]
    %v40 = vld [vmem:[%s1 + $0x58] sm:$0xff]
    %v41 = vld [vmem:[%s1 + $0x60] sm:$0xff]
    %v42 = vld [vmem:[%s1 + $0x68] sm:$0xff]
    %v43 = vld [vmem:[%s1 + $0x70] sm:$0xff]
    %v44 = vld [vmem:[%s1 + $0x78] sm:$0xff]
    %v45 = vld [vmem:[%s1 + $0x80] sm:$0xff]
    %v46 = vld [vmem:[%s1 + $0x88] sm:$0xff]
    %v47 = vld [vmem:[%s1 + $0x90] sm:$0xff]
    %v48 = vld [vmem:[%s1 + $0x98] sm:$0xff]
    %v49 = vld [vmem:[%s1 + $0xa0] sm:$0xff]
    %v50 = vld [vmem:[%s1 + $0xa8] sm:$0xff]
    %v51 = vld [vmem:[%s1 + $0xb0] sm:$0xff]
    %v52 = vld [vmem:[%s1 + $0xb8] sm:$0xff]
    %v53 = vld [vmem:[%s1 + $0xc0] sm:$0xff]
    %v54 = vld [vmem:[%s1 + $0xc8] sm:$0xff]
    %v55 = vld [vmem:[%s1 + $0xd0] sm:$0xff]
    %v56 = vld [vmem:[%s1 + $0xd8] sm:$0xff]
    %v57 = vld [vmem:[%s1 + $0xe0] sm:$0xff]
    %v58 = vld [vmem:[%s1 + $0xe8] sm:$0xff]
    %v59 = vld [vmem:[%s1 + $0xf0] sm:$0xff]
    %v60 = vld [vmem:[%s1 + $0xf8] sm:$0xff]
    %v61 = vld [vmem:[%s1 + $0x100] sm:$0xff]
    %v62 = vld [vmem:[%s1 + $0x108] sm:$0xff]
    %v63 = vld [vmem:[%s1 + $0x110] sm:$0xff]
    %v64 = vld [vmem:[%s1 + $0x118] sm:$0xff]
    %v65 = vld [vmem:[%s1 + $0x120] sm:$0xff]
    %v66 = vld [vmem:[%s1 + $0x128] sm:$0xff]
    %v67 = vld [vmem:[%s1 + $0x130] sm:$0xff]
    %v68 = vld [vmem:[%s1 + $0x138] sm:$0xff]
    %v69 = vld [vmem:[%s1 + $0x140] sm:$0xff]
    %v70 = vld [vmem:[%s1 + $0x148] sm:$0xff]
    %v71 = vld [vmem:[%s1 + $0x150] sm:$0xff]
    %v72 = vld [vmem:[%s1 + $0x158] sm:$0xff]
    %v73 = vld [vmem:[%s1 + $0x160] sm:$0xff]
    %v74 = vld [vmem:[%s1 + $0x168] sm:$0xff]
    %v75 = vld [vmem:[%s1 + $0x170] sm:$0xff]
    %v76 = vld [vmem:[%s1 + $0x178] sm:$0xff]
    %v77 = vld [vmem:[%s1 + $0x180] sm:$0xff]
    %v78 = vld [vmem:[%s1 + $0x188] sm:$0xff]
    %v79 = vld [vmem:[%s1 + $0x190] sm:$0xff]
    %v80 = vld [vmem:[%s1 + $0x198] sm:$0xff]
    %v81 = vld [vmem:[%s1 + $0x1a0] sm:$0xff]
    %v82 = vld [vmem:[%s1 + $0x1a8] sm:$0xff]
    %v83 = vld [vmem:[%s1 + $0x1b0] sm:$0xff]
    %v84 = vld [vmem:[%s1 + $0x1b8] sm:$0xff]
    %v85 = vld [vmem:[%s1 + $0x1c0] sm:$0xff]
    %v86 = vld [vmem:[%s1 + $0x1c8] sm:$0xff]
    %v87 = vld [vmem:[%s1 + $0x1d0] sm:$0xff]
    %v88 = vld [vmem:[%s1 + $0x1d8] sm:$0xff]
    %v89 = vld [vmem:[%s1 + $0x1e0] sm:$0xff]
    %v90 = vld [vmem:[%s1 + $0x1e8] sm:$0xff]
    %v91 = vld [vmem:[%s1 + $0x1f0] sm:$0xff]
    %v92 = vld [vmem:[%s1 + $0x1f8] sm:$0xff]
    %v93 = vld [vmem:[%s1 + $0x200] sm:$0xff]
    %v94 = vld [vmem:[%s1 + $0x208] sm:$0xff]
    %v95 = vld [vmem:[%s1 + $0x210] sm:$0xff]
    %v96 = vld [vmem:[%s1 + $0x218] sm:$0xff]
    %v97 = vld [vmem:[%s1 + $0x220] sm:$0xff]
    %v98 = vld [vmem:[%s1 + $0x228] sm:$0xff]
    %v99 = vld [vmem:[%s1 + $0x230] sm:$0xff]
    %v100 = vld [vmem:[%s1 + $0x238] sm:$0xff]
    %v101 = vld [vmem:[%s1 + $0x240] sm:$0xff]
    %v102 = vld [vmem:[%s1 + $0x248] sm:$0xff]
    %v103 = vld [vmem:[%s1 + $0x250] sm:$0xff]
    %v104 = vld [vmem:[%s1 + $0x258] sm:$0xff]
    %v105 = vld [vmem:[%s1 + $0x260] sm:$0xff]
    %v106 = vld [vmem:[%s1 + $0x268] sm:$0xff]
    %v107 = vld [vmem:[%s1 + $0x270] sm:$0xff]
    %v108 = vld [vmem:[%s1 + $0x278] sm:$0xff]
    %v109 = vld [vmem:[%s1 + $0x280] sm:$0xff]
    %v110 = vld [vmem:[%s1 + $0x288] sm:$0xff]
    %v111 = vld [vmem:[%s1 + $0x290] sm:$0xff]
    %v112 = vld [vmem:[%s1 + $0x298] sm:$0xff]
    %v113 = vld [vmem:[%s1 + $0x2a0] sm:$0xff]
    %v114 = vld [vmem:[%s1 + $0x2a8] sm:$0xff]
    %v115 = vld [vmem:[%s1 + $0x2b0] sm:$0xff]
    %v116 = vld [vmem:[%s1 + $0x2b8] sm:$0xff]
    %v117 = vld [vmem:[%s1 + $0x2c0] sm:$0xff]
    %v118 = vld [vmem:[%s1 + $0x2c8] sm:$0xff]
    %v119 = vld [vmem:[%s1 + $0x2d0] sm:$0xff]
    %v120 = vld [vmem:[%s1 + $0x2d8] sm:$0xff]
    %v121 = vld [vmem:[%s1 + $0x2e0] sm:$0xff]
    %v122 = vld [vmem:[%s1 + $0x2e8] sm:$0xff]
    %v123 = vld [vmem:[%s1 + $0x2f0] sm:$0xff]
    %v124 = vld [vmem:[%s1 + $0x2f8] sm:$0xff]
    %v125 = vld [vmem:[%s1 + $0x300] sm:$0xff]
    %v126 = vld [vmem:[%s1 + $0x308] sm:$0xff]
    %v127 = vld [vmem:[%s1 + $0x310] sm:$0xff]
    %v128 = vld [vmem:[%s1 + $0x318] sm:$0xff]
    %v129 = vld [vmem:[%s1 + $0x320] sm:$0xff]
    %v130 = vld [vmem:[%s1 + $0x328] sm:$0xff]
    %v131 = vld [vmem:[%s1 + $0x330] sm:$0xff]
    %v132 = vld [vmem:[%s1 + $0x338] sm:$0xff]
    %v133 = vld [vmem:[%s1 + $0x340] sm:$0xff]
    %v134 = vld [vmem:[%s1 + $0x348] sm:$0xff]
    %v135 = vld [vmem:[%s1 + $0x350] sm:$0xff]
    %v136 = vld [vmem:[%s1 + $0x358] sm:$0xff]
    %v137 = vld [vmem:[%s1 + $0x360] sm:$0xff]
    %v138 = vld [vmem:[%s1 + $0x368] sm:$0xff]
    %v139 = vld [vmem:[%s1 + $0x370] sm:$0xff]
    %v140 = vld [vmem:[%s1 + $0x378] sm:$0xff]
    %v141 = vld [vmem:[%s1 + $0x380] sm:$0xff]
    %v142 = vld [vmem:[%s1 + $0x388] sm:$0xff]
    %v143 = vld [vmem:[%s1 + $0x390] sm:$0xff]
    %v144 = vld [vmem:[%s1 + $0x398] sm:$0xff]
    %v145 = vld [vmem:[%s1 + $0x3a0] sm:$0xff]
    %v146 = vld [vmem:[%s1 + $0x3a8] sm:$0xff]
    %v147 = vld [vmem:[%s1 + $0x3b0] sm:$0xff]
    %v148 = vld [vmem:[%s1 + $0x3b8] sm:$0xff]
    %v149 = vld [vmem:[%s1 + $0x3c0] sm:$0xff]
    %v150 = vld [vmem:[%s1 + $0x3c8] sm:$0xff]
    %v151 = vld [vmem:[%s1 + $0x3d0] sm:$0xff]
    %v152 = vld [vmem:[%s1 + $0x3d8] sm:$0xff]
    %v153 = vld [vmem:[%s1 + $0x3e0] sm:$0xff]
    %v154 = vld [vmem:[%s1 + $0x3e8] sm:$0xff]
    %v155 = vld [vmem:[%s1 + $0x3f0] sm:$0xff]
    %v156 = vld [vmem:[%s1 + $0x3f8] sm:$0xff]
    %v157 = vld [vmem:[%s2] sm:$0x1]
    %v159 = vlaneseq
    %v160 = vshrl.u32 %v159, 7
    %v161 = vsub.s32 0, %v160
    %v162 = vrot.slane %v157, %v161
    %164 = vmatprep.subr.mxu0 0.0
    %165 = vmatpush1.msra.mxu0 %v29
    %166 = vmatprep.subr.mxu0 0.0
    %167 = vmatpush1.msra.mxu0 %v30
    %168 = vmatprep.subr.mxu0 0.0
    %169 = vmatpush1.msra.mxu0 %v31
    %170 = vmatprep.subr.mxu0 0.0
    %171 = vmatpush1.msra.mxu0 %v32
    %172 = vmatprep.subr.mxu0 0.0
    %173 = vmatpush1.msra.mxu0 %v33
    %174 = vmatprep.subr.mxu0 0.0
    %175 = vmatpush1.msra.mxu0 %v34
    %176 = vmatprep.subr.mxu0 0.0
    %177 = vmatpush1.msra.mxu0 %v35
    %178 = vmatprep.subr.mxu0 0.0
    %179 = vmatpush1.msra.mxu0 %v36
    %180 = vmatprep.subr.mxu0 0.0
    %181 = vmatpush1.msra.mxu0 %v37
    %182 = vmatprep.subr.mxu0 0.0
    %183 = vmatpush1.msra.mxu0 %v38
    %184 = vmatprep.subr.mxu0 0.0
    %185 = vmatpush1.msra.mxu0 %v39
    %186 = vmatprep.subr.mxu0 0.0
    %187 = vmatpush1.msra.mxu0 %v40
    %188 = vmatprep.subr.mxu0 0.0
    %189 = vmatpush1.msra.mxu0 %v41
    %190 = vmatprep.subr.mxu0 0.0
    %191 = vmatpush1.msra.mxu0 %v42
    %192 = vmatprep.subr.mxu0 0.0
    %193 = vmatpush1.msra.mxu0 %v43
    %194 = vmatprep.subr.mxu0 0.0
    %195 = vmatpush1.msra.mxu0 %v44
    %196 = vmatprep.subr.mxu0 0.0
    %197 = vmatpush1.msra.mxu0 %v45
    %198 = vmatprep.subr.mxu0 0.0
    %199 = vmatpush1.msra.mxu0 %v46
    %200 = vmatprep.subr.mxu0 0.0
    %201 = vmatpush1.msra.mxu0 %v47
    %202 = vmatprep.subr.mxu0 0.0
    %203 = vmatpush1.msra.mxu0 %v48
    %204 = vmatprep.subr.mxu0 0.0
    %205 = vmatpush1.msra.mxu0 %v49
    %206 = vmatprep.subr.mxu0 0.0
    %207 = vmatpush1.msra.mxu0 %v50
    %208 = vmatprep.subr.mxu0 0.0
    %209 = vmatpush1.msra.mxu0 %v51
    %210 = vmatprep.subr.mxu0 0.0
    %211 = vmatpush1.msra.mxu0 %v52
    %212 = vmatprep.subr.mxu0 0.0
    %213 = vmatpush1.msra.mxu0 %v53
    %214 = vmatprep.subr.mxu0 0.0
    %215 = vmatpush1.msra.mxu0 %v54
    %216 = vmatprep.subr.mxu0 0.0
    %217 = vmatpush1.msra.mxu0 %v55
    %218 = vmatprep.subr.mxu0 0.0
    %219 = vmatpush1.msra.mxu0 %v56
    %220 = vmatprep.subr.mxu0 0.0
    %221 = vmatpush1.msra.mxu0 %v57
    %222 = vmatprep.subr.mxu0 0.0
    %223 = vmatpush1.msra.mxu0 %v58
    %224 = vmatprep.subr.mxu0 0.0
    %225 = vmatpush1.msra.mxu0 %v59
    %226 = vmatprep.subr.mxu0 0.0
    %227 = vmatpush1.msra.mxu0 %v60
    %228 = vmatprep.mubr.f32.mxu0 %v22
    %229 = vmatmul.mubr.f32.gmra.mrb[0].mxu0 %v21
    %v230 = vpop.f32.mrb[0].mxu0
    %v231 = vadd.f32 %v162, %v230
    %v232 = vpop.f32.mrb[0].mxu0
    %233 = vdwg.mxu0
    %234 = vmatprep.subr.mxu0 0.0
    %235 = vmatpush1.msra.mxu0 %v61
    %236 = vmatprep.subr.mxu0 0.0
    %237 = vmatpush1.msra.mxu0 %v62
    %238 = vmatprep.subr.mxu0 0.0
    %239 = vmatpush1.msra.mxu0 %v63
    %240 = vmatprep.subr.mxu0 0.0
    %241 = vmatpush1.msra.mxu0 %v64
    %242 = vmatprep.subr.mxu0 0.0
    %243 = vmatpush1.msra.mxu0 %v65
    %244 = vmatprep.subr.mxu0 0.0
    %245 = vmatpush1.msra.mxu0 %v66
    %246 = vmatprep.subr.mxu0 0.0
    %247 = vmatpush1.msra.mxu0 %v67
    %248 = vmatprep.subr.mxu0 0.0
    %249 = vmatpush1.msra.mxu0 %v68
    %250 = vmatprep.subr.mxu0 0.0
    %251 = vmatpush1.msra.mxu0 %v69
    %252 = vmatprep.subr.mxu0 0.0
    %253 = vmatpush1.msra.mxu0 %v70
    %254 = vmatprep.subr.mxu0 0.0
    %255 = vmatpush1.msra.mxu0 %v71
    %256 = vmatprep.subr.mxu0 0.0
    %257 = vmatpush1.msra.mxu0 %v72
    %258 = vmatprep.subr.mxu0 0.0
    %259 = vmatpush1.msra.mxu0 %v73
    %260 = vmatprep.subr.mxu0 0.0
    %261 = vmatpush1.msra.mxu0 %v74
    %262 = vmatprep.subr.mxu0 0.0
    %263 = vmatpush1.msra.mxu0 %v75
    %264 = vmatprep.subr.mxu0 0.0
    %265 = vmatpush1.msra.mxu0 %v76
    %266 = vmatprep.subr.mxu0 0.0
    %267 = vmatpush1.msra.mxu0 %v77
    %268 = vmatprep.subr.mxu0 0.0
    %269 = vmatpush1.msra.mxu0 %v78
    %270 = vmatprep.subr.mxu0 0.0
    %271 = vmatpush1.msra.mxu0 %v79
    %272 = vmatprep.subr.mxu0 0.0
    %273 = vmatpush1.msra.mxu0 %v80
    %274 = vmatprep.subr.mxu0 0.0
    %275 = vmatpush1.msra.mxu0 %v81
    %276 = vmatprep.subr.mxu0 0.0
    %277 = vmatpush1.msra.mxu0 %v82
    %278 = vmatprep.subr.mxu0 0.0
    %279 = vmatpush1.msra.mxu0 %v83
    %280 = vmatprep.subr.mxu0 0.0
    %281 = vmatpush1.msra.mxu0 %v84
    %282 = vmatprep.subr.mxu0 0.0
    %283 = vmatpush1.msra.mxu0 %v85
    %284 = vmatprep.subr.mxu0 0.0
    %285 = vmatpush1.msra.mxu0 %v86
    %286 = vmatprep.subr.mxu0 0.0
    %287 = vmatpush1.msra.mxu0 %v87
    %288 = vmatprep.subr.mxu0 0.0
    %289 = vmatpush1.msra.mxu0 %v88
    %290 = vmatprep.subr.mxu0 0.0
    %291 = vmatpush1.msra.mxu0 %v89
    %292 = vmatprep.subr.mxu0 0.0
    %293 = vmatpush1.msra.mxu0 %v90
    %294 = vmatprep.subr.mxu0 0.0
    %295 = vmatpush1.msra.mxu0 %v91
    %296 = vmatprep.subr.mxu0 0.0
    %297 = vmatpush1.msra.mxu0 %v92
    %298 = vmatprep.mubr.f32.mxu0 %v24
    %299 = vmatmul.mubr.f32.gmra.mrb[0].mxu0 %v23
    %v300 = vpop.f32.mrb[0].mxu0
    %v301 = vadd.f32 %v231, %v300
    %v302 = vpop.f32.mrb[0].mxu0
    %303 = vdwg.mxu0
    %304 = vmatprep.subr.mxu0 0.0
    %305 = vmatpush1.msra.mxu0 %v93
    %306 = vmatprep.subr.mxu0 0.0
    %307 = vmatpush1.msra.mxu0 %v94
    %308 = vmatprep.subr.mxu0 0.0
    %309 = vmatpush1.msra.mxu0 %v95
    %310 = vmatprep.subr.mxu0 0.0
    %311 = vmatpush1.msra.mxu0 %v96
    %312 = vmatprep.subr.mxu0 0.0
    %313 = vmatpush1.msra.mxu0 %v97
    %314 = vmatprep.subr.mxu0 0.0
    %315 = vmatpush1.msra.mxu0 %v98
    %316 = vmatprep.subr.mxu0 0.0
    %317 = vmatpush1.msra.mxu0 %v99
    %318 = vmatprep.subr.mxu0 0.0
    %319 = vmatpush1.msra.mxu0 %v100
    %320 = vmatprep.subr.mxu0 0.0
    %321 = vmatpush1.msra.mxu0 %v101
    %322 = vmatprep.subr.mxu0 0.0
    %323 = vmatpush1.msra.mxu0 %v102
    %324 = vmatprep.subr.mxu0 0.0
    %325 = vmatpush1.msra.mxu0 %v103
    %326 = vmatprep.subr.mxu0 0.0
    %327 = vmatpush1.msra.mxu0 %v104
    %328 = vmatprep.subr.mxu0 0.0
    %329 = vmatpush1.msra.mxu0 %v105
    %330 = vmatprep.subr.mxu0 0.0
    %331 = vmatpush1.msra.mxu0 %v106
    %332 = vmatprep.subr.mxu0 0.0
    %333 = vmatpush1.msra.mxu0 %v107
    %334 = vmatprep.subr.mxu0 0.0
    %335 = vmatpush1.msra.mxu0 %v108
    %336 = vmatprep.subr.mxu0 0.0
    %337 = vmatpush1.msra.mxu0 %v109
    %338 = vmatprep.subr.mxu0 0.0
    %339 = vmatpush1.msra.mxu0 %v110
    %340 = vmatprep.subr.mxu0 0.0
    %341 = vmatpush1.msra.mxu0 %v111
    %342 = vmatprep.subr.mxu0 0.0
    %343 = vmatpush1.msra.mxu0 %v112
    %344 = vmatprep.subr.mxu0 0.0
    %345 = vmatpush1.msra.mxu0 %v113
    %346 = vmatprep.subr.mxu0 0.0
    %347 = vmatpush1.msra.mxu0 %v114
    %348 = vmatprep.subr.mxu0 0.0
    %349 = vmatpush1.msra.mxu0 %v115
    %350 = vmatprep.subr.mxu0 0.0
    %351 = vmatpush1.msra.mxu0 %v116
    %352 = vmatprep.subr.mxu0 0.0
    %353 = vmatpush1.msra.mxu0 %v117
    %354 = vmatprep.subr.mxu0 0.0
    %355 = vmatpush1.msra.mxu0 %v118
    %356 = vmatprep.subr.mxu0 0.0
    %357 = vmatpush1.msra.mxu0 %v119
    %358 = vmatprep.subr.mxu0 0.0
    %359 = vmatpush1.msra.mxu0 %v120
    %360 = vmatprep.subr.mxu0 0.0
    %361 = vmatpush1.msra.mxu0 %v121
    %362 = vmatprep.subr.mxu0 0.0
    %363 = vmatpush1.msra.mxu0 %v122
    %364 = vmatprep.subr.mxu0 0.0
    %365 = vmatpush1.msra.mxu0 %v123
    %366 = vmatprep.subr.mxu0 0.0
    %367 = vmatpush1.msra.mxu0 %v124
    %368 = vmatprep.mubr.f32.mxu0 %v26
    %369 = vmatmul.mubr.f32.gmra.mrb[0].mxu0 %v25
    %v370 = vpop.f32.mrb[0].mxu0
    %v371 = vadd.f32 %v301, %v370
    %v372 = vpop.f32.mrb[0].mxu0
    %373 = vdwg.mxu0
    %374 = vmatprep.subr.mxu0 0.0
    %375 = vmatpush1.msra.mxu0 %v125
    %376 = vmatprep.subr.mxu0 0.0
    %377 = vmatpush1.msra.mxu0 %v126
    %378 = vmatprep.subr.mxu0 0.0
    %379 = vmatpush1.msra.mxu0 %v127
    %380 = vmatprep.subr.mxu0 0.0
    %381 = vmatpush1.msra.mxu0 %v128
    %382 = vmatprep.subr.mxu0 0.0
    %383 = vmatpush1.msra.mxu0 %v129
    %384 = vmatprep.subr.mxu0 0.0
    %385 = vmatpush1.msra.mxu0 %v130
    %386 = vmatprep.subr.mxu0 0.0
    %387 = vmatpush1.msra.mxu0 %v131
    %388 = vmatprep.subr.mxu0 0.0
    %389 = vmatpush1.msra.mxu0 %v132
    %390 = vmatprep.subr.mxu0 0.0
    %391 = vmatpush1.msra.mxu0 %v133
    %392 = vmatprep.subr.mxu0 0.0
    %393 = vmatpush1.msra.mxu0 %v134
    %394 = vmatprep.subr.mxu0 0.0
    %395 = vmatpush1.msra.mxu0 %v135
    %396 = vmatprep.subr.mxu0 0.0
    %397 = vmatpush1.msra.mxu0 %v136
    %398 = vmatprep.subr.mxu0 0.0
    %399 = vmatpush1.msra.mxu0 %v137
    %400 = vmatprep.subr.mxu0 0.0
    %401 = vmatpush1.msra.mxu0 %v138
    %402 = vmatprep.subr.mxu0 0.0
    %403 = vmatpush1.msra.mxu0 %v139
    %404 = vmatprep.subr.mxu0 0.0
    %405 = vmatpush1.msra.mxu0 %v140
    %406 = vmatprep.subr.mxu0 0.0
    %407 = vmatpush1.msra.mxu0 %v141
    %408 = vmatprep.subr.mxu0 0.0
    %409 = vmatpush1.msra.mxu0 %v142
    %410 = vmatprep.subr.mxu0 0.0
    %411 = vmatpush1.msra.mxu0 %v143
    %412 = vmatprep.subr.mxu0 0.0
    %413 = vmatpush1.msra.mxu0 %v144
    %414 = vmatprep.subr.mxu0 0.0
    %415 = vmatpush1.msra.mxu0 %v145
    %416 = vmatprep.subr.mxu0 0.0
    %417 = vmatpush1.msra.mxu0 %v146
    %418 = vmatprep.subr.mxu0 0.0
    %419 = vmatpush1.msra.mxu0 %v147
    %420 = vmatprep.subr.mxu0 0.0
    %421 = vmatpush1.msra.mxu0 %v148
    %422 = vmatprep.subr.mxu0 0.0
    %423 = vmatpush1.msra.mxu0 %v149
    %424 = vmatprep.subr.mxu0 0.0
    %425 = vmatpush1.msra.mxu0 %v150
    %426 = vmatprep.subr.mxu0 0.0
    %427 = vmatpush1.msra.mxu0 %v151
    %428 = vmatprep.subr.mxu0 0.0
    %429 = vmatpush1.msra.mxu0 %v152
    %430 = vmatprep.subr.mxu0 0.0
    %431 = vmatpush1.msra.mxu0 %v153
    %432 = vmatprep.subr.mxu0 0.0
    %433 = vmatpush1.msra.mxu0 %v154
    %434 = vmatprep.subr.mxu0 0.0
    %435 = vmatpush1.msra.mxu0 %v155
    %436 = vmatprep.subr.mxu0 0.0
    %437 = vmatpush1.msra.mxu0 %v156
    %438 = vmatprep.mubr.f32.mxu0 %v28
    %439 = vmatmul.mubr.f32.gmra.mrb[0].mxu0 %v27
    %v440 = vpop.f32.mrb[0].mxu0
    %v441 = vadd.f32 %v371, %v440
    %v442 = vpop.f32.mrb[0].mxu0
    %443 = vdwg.mxu0
    %v444 = vmax.f32 %v441, 0.0
    %v445 = vld [vmem:[%s3] sm:$0xff]
    %v446 = vld [vmem:[%s3 + $0x8] sm:$0xff]
    %v447 = vld [vmem:[%s3 + $0x10] sm:$0xff]
    %v448 = vld [vmem:[%s3 + $0x18] sm:$0xff]
    %v449 = vld [vmem:[%s3 + $0x20] sm:$0xff]
    %v450 = vld [vmem:[%s3 + $0x28] sm:$0xff]
    %v451 = vld [vmem:[%s3 + $0x30] sm:$0xff]
    %v452 = vld [vmem:[%s3 + $0x38] sm:$0xff]
    %v453 = vld [vmem:[%s3 + $0x40] sm:$0xff]
    %v454 = vld [vmem:[%s3 + $0x48] sm:$0xff]
    %v455 = vld [vmem:[%s3 + $0x50] sm:$0xff]
    %v456 = vld [vmem:[%s3 + $0x58] sm:$0xff]
    %v457 = vld [vmem:[%s3 + $0x60] sm:$0xff]
    %v458 = vld [vmem:[%s3 + $0x68] sm:$0xff]
    %v459 = vld [vmem:[%s3 + $0x70] sm:$0xff]
    %v460 = vld [vmem:[%s3 + $0x78] sm:$0xff]
    %v461 = vld [vmem:[%s4] sm:$0x1]
    %v463 = vlaneseq
    %v464 = vshrl.u32 %v463, 7
    %v465 = vsub.s32 0, %v464
    %v466 = vrot.slane %v461, %v465
    %468 = vmatprep.subr.mxu0 0.0
    %469 = vmatpush1.msra.mxu0 %v445
    %470 = vmatprep.subr.mxu0 0.0
    %471 = vmatpush1.msra.mxu0 %v446
    %472 = vmatprep.subr.mxu0 0.0
    %473 = vmatpush1.msra.mxu0 %v447
    %474 = vmatprep.subr.mxu0 0.0
    %475 = vmatpush1.msra.mxu0 %v448
    %476 = vmatprep.subr.mxu0 0.0
    %477 = vmatpush1.msra.mxu0 %v449
    %478 = vmatprep.subr.mxu0 0.0
    %479 = vmatpush1.msra.mxu0 %v450
    %480 = vmatprep.subr.mxu0 0.0
    %481 = vmatpush1.msra.mxu0 %v451
    %482 = vmatprep.subr.mxu0 0.0
    %483 = vmatpush1.msra.mxu0 %v452
    %484 = vmatprep.subr.mxu0 0.0
    %485 = vmatpush1.msra.mxu0 %v453
    %486 = vmatprep.subr.mxu0 0.0
    %487 = vmatpush1.msra.mxu0 %v454
    %488 = vmatprep.subr.mxu0 0.0
    %489 = vmatpush1.msra.mxu0 %v455
    %490 = vmatprep.subr.mxu0 0.0
    %491 = vmatpush1.msra.mxu0 %v456
    %492 = vmatprep.subr.mxu0 0.0
    %493 = vmatpush1.msra.mxu0 %v457
    %494 = vmatprep.subr.mxu0 0.0
    %495 = vmatpush1.msra.mxu0 %v458
    %496 = vmatprep.subr.mxu0 0.0
    %497 = vmatpush1.msra.mxu0 %v459
    %498 = vmatprep.subr.mxu0 0.0
    %499 = vmatpush1.msra.mxu0 %v460
    %500 = vmatprep.subr.mxu0 0.0
    %501 = vmatpush1.msra.mxu0 0.0
    %502 = vmatprep.subr.mxu0 0.0
    %503 = vmatpush1.msra.mxu0 0.0
    %504 = vmatprep.subr.mxu0 0.0
    %505 = vmatpush1.msra.mxu0 0.0
    %506 = vmatprep.subr.mxu0 0.0
    %507 = vmatpush1.msra.mxu0 0.0
    %508 = vmatprep.subr.mxu0 0.0
    %509 = vmatpush1.msra.mxu0 0.0
    %510 = vmatprep.subr.mxu0 0.0
    %511 = vmatpush1.msra.mxu0 0.0
    %512 = vmatprep.subr.mxu0 0.0
    %513 = vmatpush1.msra.mxu0 0.0
    %514 = vmatprep.subr.mxu0 0.0
    %515 = vmatpush1.msra.mxu0 0.0
    %516 = vmatprep.subr.mxu0 0.0
    %517 = vmatpush1.msra.mxu0 0.0
    %518 = vmatprep.subr.mxu0 0.0
    %519 = vmatpush1.msra.mxu0 0.0
    %520 = vmatprep.subr.mxu0 0.0
    %521 = vmatpush1.msra.mxu0 0.0
    %522 = vmatprep.subr.mxu0 0.0
    %523 = vmatpush1.msra.mxu0 0.0
    %524 = vmatprep.subr.mxu0 0.0
    %525 = vmatpush1.msra.mxu0 0.0
    %526 = vmatprep.subr.mxu0 0.0
    %527 = vmatpush1.msra.mxu0 0.0
    %528 = vmatprep.subr.mxu0 0.0
    %529 = vmatpush1.msra.mxu0 0.0
    %530 = vmatprep.subr.mxu0 0.0
    %531 = vmatpush1.msra.mxu0 0.0
    %532 = vmatprep.mubr.f32.mxu0 0.0
    %533 = vmatmul.mubr.f32.gmra.mrb[0].mxu0 %v444
    %v534 = vpop.f32.mrb[0].mxu0
    %v535 = vadd.f32 %v466, %v534
    %v536 = vpop.f32.mrb[0].mxu0
    %537 = vdwg.mxu0
    %538 = vst [vmem:[#allocation2] sm:$0xff] %v535
    // Predicated region
    $region22: #{two_layer_net.1} parent=1 // pred_check
      _
    $region23: #{two_layer_net.1} parent=1 // pred_check_branch
      %540 = sbr.rel (0) target = $region25
    $region24: #{two_layer_net.1} parent=1 // pred_region
      %s542 = ssub.s32 128, 128
      %543 = vsyncadd [#allocation3], %s542
      %s545 = sshll.u32 [#allocation2], 4
      %s546 = int_to_ptr.vmem [resolvable:$true] %s545
      %548 = dma.vmem_to_hbm [thread:$0]  %s546, 128, %s5, [#allocation3]
    $region25: #{two_layer_net.1} parent=1 // pred_fallthru
      _
    // Predicated region
    $region26: #{two_layer_net.1} parent=1 // pred_check
      _
    $region27: #{two_layer_net.1} parent=1 // pred_check_branch
      %550 = sbr.rel (0) target = $region29
    $region28: #{two_layer_net.1} parent=1 // pred_region
      %551 = dma.done [#allocation3], 128
    $region29: #{two_layer_net.1} parent=1 // pred_fallthru
      _
    %552 = vsyncpa [#allocation3], 1

</llo_original>
